<compile_context>
chip_gen: v5e
topology: v5e:2x2
jax: 0.10.0
libtpu: 0.0.40
codegen_flags: <defaults>
</compile_context>

<pallas_src>
import functools

import numpy as np
import jax
import jax.numpy as jnp
from jax.experimental import pallas as pl
from jax.experimental.pallas import tpu as pltpu


def _round_up(x, m):
    return (x + m - 1) // m * m


def _ce_loss_kernel(logits_ref, target_ref, w_ref, num_ref, den_ref, *, n_rows):
    p = pl.program_id(0)          # parallel split (TensorCore on v7x)
    t = pl.program_id(1)          # tile within the split (arbitrary / reduction)
    tiles_per_split = pl.num_programs(1)

    # Zero this split's partial accumulators at the start of its tile loop.
    @pl.when(t == 0)
    def _init():
        num_ref[...] = jnp.zeros_like(num_ref)
        den_ref[...] = jnp.zeros_like(den_ref)

    x = logits_ref[...]                                    # (TN, C), native dtype
    tgt = target_ref[...]                                  # (TN, 1), int32
    tn, c = x.shape

    col = jax.lax.broadcasted_iota(jnp.int32, (tn, c), 1)
    is_tgt = col == tgt                                    # (TN, C) bool

    # Row max + target-logit select in the native dtype (bf16 stays packed on
    # v6e/v7x); both are exact, the heavy math below is f32.
    mx = jnp.max(x, axis=-1, keepdims=True)                # (TN, 1)
    x_t = jnp.sum(jnp.where(is_tgt, x, 0), axis=-1, keepdims=True)   # exact: one hit/row

    mx32 = mx.astype(jnp.float32)
    z = x.astype(jnp.float32) - mx32                       # (TN, C) f32
    lse = jnp.log(jnp.sum(jnp.exp(z), axis=-1, keepdims=True))       # (TN, 1)
    nll = lse - (x_t.astype(jnp.float32) - mx32)           # (TN, 1)

    # Mask rows past the real batch (last partial tile, and the clamped
    # duplicate tile of the second split when the tile count is odd).  The
    # whole term is masked so OOB garbage (NaN/Inf) cannot leak in.
    flat_tile = p * tiles_per_split + t
    row = flat_tile * tn + jax.lax.broadcasted_iota(jnp.int32, (tn, 1), 0)
    valid = row < n_rows

    w = w_ref[...]                                         # (TN, 1) f32 = weight[target]
    wnll = jnp.where(valid, w * nll, 0.0)
    wsum = jnp.where(valid, w, 0.0)

    # Scatter each tile's sums across the 128 accumulator lanes (lane = t%128)
    # so no single scalar accumulates thousands of sequential adds.
    lane = jax.lax.broadcasted_iota(jnp.int32, (1, 1, 128), 2)
    hit = lane == (t % 128)
    num_ref[...] += jnp.where(hit, jnp.sum(wnll), 0.0)
    den_ref[...] += jnp.where(hit, jnp.sum(wsum), 0.0)


def _rows_per_tile(n, c, itemsize, max_rows_per_tile):
    """Rows per tile from a ~16 MiB estimated VMEM footprint."""
    c_lanes = _round_up(c, 128)                 # VMEM lane padding of the class axis
    per_row = (2 * c_lanes * itemsize           # double-buffered native logits input
               + 3 * c_lanes * 4                # f32 full-tile temporaries (estimate)
               + 4 * 128 * 4)                   # (TN,1) target + weight, 2 buffers each
    tn = (16 * 1024 * 1024) // per_row
    tn = max(8, (tn // 8) * 8)
    tn = min(tn, 8192)
    if max_rows_per_tile is not None:
        tn = min(tn, max(8, (int(max_rows_per_tile) // 8) * 8))
    tn = min(tn, _round_up(n, 8))
    return tn


@functools.partial(jax.jit, static_argnames=("max_rows_per_tile",))
def _cross_entropy_pallas(logits, target, per_cls_weights, *, max_rows_per_tile=None):
    n, c = logits.shape
    target = target.astype(jnp.int32)

    # Per-sample weight gather (tiny, XLA-side) so the kernel needs no
    # class-weight broadcast / extra full-tile select.
    # TODO(synk): out-of-range targets are clamped by the gather instead of
    # raising like PyTorch.
    w_sample = per_cls_weights.astype(jnp.float32)[target].reshape(n, 1)
    target2d = target.reshape(n, 1)

    tn = _rows_per_tile(n, c, logits.dtype.itemsize, max_rows_per_tile)
    tiles_total = pl.cdiv(n, tn)
    n_split = 2 if tiles_total >= 2 else 1      # lets v7x use both TensorCores
    tiles_per_split = pl.cdiv(tiles_total, n_split)
    last_tile = tiles_total - 1

    def row_map(p, t):
        # Clamp so a trailing tile of the second split never maps to a fully
        # out-of-bounds block; its rows are masked in-kernel via flat_tile*tn.
        return (jnp.minimum(p * tiles_per_split + t, last_tile), 0)

    kernel = functools.partial(_ce_loss_kernel, n_rows=n)

    num_out, den_out = pl.pallas_call(
        kernel,
        out_shape=(jax.ShapeDtypeStruct((n_split, 1, 128), jnp.float32),
                   jax.ShapeDtypeStruct((n_split, 1, 128), jnp.float32)),
        grid_spec=pltpu.PrefetchScalarGridSpec(
            num_scalar_prefetch=0,
            grid=(n_split, tiles_per_split),
            in_specs=[
                pl.BlockSpec((tn, c), row_map),     # logits tile, native dtype, unpadded C
                pl.BlockSpec((tn, 1), row_map),     # targets
                pl.BlockSpec((tn, 1), row_map),     # per-sample weights
            ],
            out_specs=[
                pl.BlockSpec((1, 1, 128), lambda p, t: (p, 0, 0)),   # num partials
                pl.BlockSpec((1, 1, 128), lambda p, t: (p, 0, 0)),   # den partials
            ],
        ),
        compiler_params=pltpu.CompilerParams(
            dimension_semantics=("parallel", "arbitrary"),
            vmem_limit_bytes=48 * 1024 * 1024),
    )(logits, target2d, w_sample)

    return jnp.sum(num_out) / jnp.sum(den_out)


class CrossEntropyLoss:
    """JAX/Pallas mirror of the PyTorch CrossEntropyLoss module."""

    def __init__(self, cls_num_list=None, reweight_CE=False):
        if reweight_CE:
            idx = 1
            betas = [0, 0.9999]
            effective_num = 1.0 - np.power(betas[idx], cls_num_list)
            per_cls_weights = (1.0 - betas[idx]) / np.array(effective_num)
            per_cls_weights = (per_cls_weights / np.sum(per_cls_weights)
                               * len(cls_num_list))
            self.per_cls_weights = jnp.asarray(per_cls_weights, dtype=jnp.float32)
        else:
            self.per_cls_weights = None

    def __call__(self, output_logits, target, *, max_rows_per_tile=None):
        _, c = output_logits.shape
        w = self.per_cls_weights
        if w is None:
            # weight=None in F.cross_entropy == plain mean; ones reproduce it exactly.
            w = jnp.ones((c,), jnp.float32)
        return _cross_entropy_pallas(output_logits, target, w,
                                     max_rows_per_tile=max_rows_per_tile)


def _reference_ce(logits, target, per_cls_weights=None):
    logits = logits.astype(jnp.float32)
    logp = jax.nn.log_softmax(logits, axis=-1)
    nll = -jnp.take_along_axis(logp, target[:, None].astype(jnp.int32), axis=-1)[:, 0]
    if per_cls_weights is None:
        return jnp.mean(nll)
    w = per_cls_weights[target]
    return jnp.sum(w * nll) / jnp.sum(w)


if __name__ == "__main__":
    cls_num_list = [100, 50, 20, 10, 5, 2, 200, 80, 30, 15]   # C = 10 classes
    N, C = 8, len(cls_num_list)

    key = jax.random.PRNGKey(0)
    k1, k2, k3, k4 = jax.random.split(key, 4)
    logits = jax.random.normal(k1, (N, C), dtype=jnp.float32) * 3.0
    target = jax.random.randint(k2, (N,), 0, C, dtype=jnp.int32)

    # 1) reweight_CE=False (plain mean CE), single tile.
    plain = CrossEntropyLoss(cls_num_list, reweight_CE=False)
    loss_plain = jax.block_until_ready(plain(logits, target))
    ref_plain = _reference_ce(logits, target, None)
    assert np.allclose(np.asarray(loss_plain), np.asarray(ref_plain),
                       rtol=1e-5, atol=1e-5), (loss_plain, ref_plain)

    # 2) reweight_CE=True (per-class weighted CE).
    weighted = CrossEntropyLoss(cls_num_list, reweight_CE=True)
    loss_w = jax.block_until_ready(weighted(logits, target))
    ref_w = _reference_ce(logits, target, weighted.per_cls_weights)
    assert np.allclose(np.asarray(loss_w), np.asarray(ref_w),
                       rtol=1e-5, atol=1e-5), (loss_w, ref_w)

    # 3) bf16 logits path (native-dtype DMA + bf16 max/select, f32 exp/lse).
    loss_bf16 = jax.block_until_ready(plain(logits.astype(jnp.bfloat16), target))
    ref_bf16 = _reference_ce(logits.astype(jnp.bfloat16), target, None)
    assert np.allclose(np.asarray(loss_bf16), np.asarray(ref_bf16),
                       rtol=1e-5, atol=1e-5), (loss_bf16, ref_bf16)

    # 4) Multi-tile grid: 9 tiles of 256 rows (odd count -> exercises the
    #    clamped duplicate tile of split p=1), partial last tile (8 rows),
    #    2-way parallel split, weighted.
    N2 = 2056
    logits2 = jax.random.normal(k3, (N2, C), dtype=jnp.float32) * 3.0
    target2 = jax.random.randint(k2, (N2,), 0, C, dtype=jnp.int32)
    loss2 = jax.block_until_ready(weighted(logits2, target2, max_rows_per_tile=256))
    ref2 = _reference_ce(logits2, target2, weighted.per_cls_weights)
    assert np.allclose(np.asarray(loss2), np.asarray(ref2),
                       rtol=1e-4, atol=1e-4), (loss2, ref2)

    # 5) Lane-aligned class count (C multiple of 128) + partial last row tile.
    N3, C3 = 1000, 256
    logits3 = jax.random.normal(k4, (N3, C3), dtype=jnp.float32) * 2.0
    target3 = jax.random.randint(k2, (N3,), 0, C3, dtype=jnp.int32)
    plain_big = CrossEntropyLoss(None, reweight_CE=False)
    loss3 = jax.block_until_ready(plain_big(logits3, target3, max_rows_per_tile=128))
    ref3 = _reference_ce(logits3, target3, None)
    assert np.allclose(np.asarray(loss3), np.asarray(ref3),
                       rtol=1e-5, atol=1e-5), (loss3, ref3)

    print("KERNEL_OK")
</pallas_src>

<mosaic_0001>
module attributes {stable_mosaic.version = 11 : i64} {
  func.func @_ce_loss_kernel(%arg0: i32, %arg1: i32, %arg2: memref<8x10xf32, #tpu.memory_space<vmem>>, %arg3: memref<8x1xi32, #tpu.memory_space<vmem>>, %arg4: memref<8x1xf32, #tpu.memory_space<vmem>>, %arg5: memref<1x1x128xf32, #tpu.memory_space<vmem>>, %arg6: memref<1x1x128xf32, #tpu.memory_space<vmem>>) attributes {dimension_semantics = [#tpu.dimension_semantics<parallel>, #tpu.dimension_semantics<arbitrary>], iteration_bounds = array<i64: 1, 1>, scalar_prefetch = 0 : i64, scratch_operands = 0 : i64, tpu.core_type = #tpu.core_type<tc>, window_params = [{transform_indices = @transform_0, window_bounds = array<i64: 8, 10>}, {transform_indices = @transform_1, window_bounds = array<i64: 8, 1>}, {transform_indices = @transform_2, window_bounds = array<i64: 8, 1>}, {transform_indices = @transform_3, window_bounds = array<i64: 1, 1, 128>}, {transform_indices = @transform_4, window_bounds = array<i64: 1, 1, 128>}]} {
    %c0_i32 = arith.constant 0 : i32
    %0 = arith.cmpi eq, %arg1, %c0_i32 : i32
    %1 = arith.extui %0 : i1 to i32
    %c0_i32_0 = arith.constant 0 : i32
    %2 = arith.cmpi ne, %1, %c0_i32_0 : i32
    scf.if %2 {
      %cst_33 = arith.constant 0.000000e+00 : f32
      %70 = vector.broadcast %cst_33 : f32 to vector<1x1x128xf32>
      %c0_34 = arith.constant 0 : index
      %c0_35 = arith.constant 0 : index
      %c0_36 = arith.constant 0 : index
      %71 = vector.load %arg5[%c0_34, %c0_35, %c0_36] : memref<1x1x128xf32, #tpu.memory_space<vmem>>, vector<1x1x128xf32>
      tpu.vector_store %arg5[%c0_34, %c0_35, %c0_36], %70 {strides = array<i32>} : memref<1x1x128xf32, #tpu.memory_space<vmem>>, vector<1x1x128xf32>,
      %cst_37 = arith.constant 0.000000e+00 : f32
      %72 = vector.broadcast %cst_37 : f32 to vector<1x1x128xf32>
      %c0_38 = arith.constant 0 : index
      %c0_39 = arith.constant 0 : index
      %c0_40 = arith.constant 0 : index
      %73 = vector.load %arg6[%c0_38, %c0_39, %c0_40] : memref<1x1x128xf32, #tpu.memory_space<vmem>>, vector<1x1x128xf32>
      tpu.vector_store %arg6[%c0_38, %c0_39, %c0_40], %72 {strides = array<i32>} : memref<1x1x128xf32, #tpu.memory_space<vmem>>, vector<1x1x128xf32>,
    } else {
    }
    %c0 = arith.constant 0 : index
    %c0_1 = arith.constant 0 : index
    %3 = vector.load %arg2[%c0, %c0_1] : memref<8x10xf32, #tpu.memory_space<vmem>>, vector<8x10xf32>
    %c0_2 = arith.constant 0 : index
    %c0_3 = arith.constant 0 : index
    %4 = vector.load %arg3[%c0_2, %c0_3] : memref<8x1xi32, #tpu.memory_space<vmem>>, vector<8x1xi32>
    %5 = tpu.iota {dimensions = array<i32: 1>} : vector<8x10xi32>
    %6 = vector.broadcast %4 : vector<8x1xi32> to vector<8x10xi32>
    %7 = arith.cmpi eq, %5, %6 : vector<8x10xi32>
    %cst = arith.constant dense<0xFF800000> : vector<8xf32>
    %8 = vector.multi_reduction <maximumf>, %3, %cst [1] : vector<8x10xf32> to vector<8xf32>
    %9 = vector.shape_cast %8 : vector<8xf32> to vector<8x1xf32>
    %c0_i32_4 = arith.constant 0 : i32
    %10 = arith.sitofp %c0_i32_4 : i32 to f32
    %11 = vector.broadcast %10 : f32 to vector<8x10xf32>
    %12 = arith.select %7, %3, %11 : vector<8x10xi1>, vector<8x10xf32>
    %cst_5 = arith.constant dense<0.000000e+00> : vector<8xf32>
    %13 = vector.multi_reduction <add>, %12, %cst_5 [1] : vector<8x10xf32> to vector<8xf32>
    %14 = vector.shape_cast %13 : vector<8xf32> to vector<8x1xf32>
    %15 = vector.broadcast %9 : vector<8x1xf32> to vector<8x10xf32>
    %16 = arith.subf %3, %15 : vector<8x10xf32>
    %17 = math.exp %16 : vector<8x10xf32>
    %cst_6 = arith.constant dense<0.000000e+00> : vector<8xf32>
    %18 = vector.multi_reduction <add>, %17, %cst_6 [1] : vector<8x10xf32> to vector<8xf32>
    %19 = vector.shape_cast %18 : vector<8xf32> to vector<8x1xf32>
    %20 = math.log %19 : vector<8x1xf32>
    %21 = arith.subf %14, %9 : vector<8x1xf32>
    %22 = arith.subf %20, %21 : vector<8x1xf32>
    %c1_i32 = arith.constant 1 : i32
    %23 = arith.muli %arg0, %c1_i32 : i32
    %24 = arith.addi %23, %arg1 : i32
    %c8_i32 = arith.constant 8 : i32
    %25 = arith.muli %24, %c8_i32 : i32
    %26 = tpu.iota {dimensions = array<i32: 0>} : vector<8x1xi32>
    %27 = vector.broadcast %25 : i32 to vector<8x1xi32>
    %28 = arith.addi %27, %26 : vector<8x1xi32>
    %c8_i32_7 = arith.constant 8 : i32
    %29 = vector.broadcast %c8_i32_7 : i32 to vector<8x1xi32>
    %30 = arith.cmpi slt, %28, %29 : vector<8x1xi32>
    %c0_8 = arith.constant 0 : index
    %c0_9 = arith.constant 0 : index
    %31 = vector.load %arg4[%c0_8, %c0_9] : memref<8x1xf32, #tpu.memory_space<vmem>>, vector<8x1xf32>
    %32 = arith.mulf %31, %22 : vector<8x1xf32>
    %cst_10 = arith.constant 0.000000e+00 : f32
    %33 = vector.broadcast %cst_10 : f32 to vector<8x1xf32>
    %34 = arith.select %30, %32, %33 : vector<8x1xi1>, vector<8x1xf32>
    %cst_11 = arith.constant 0.000000e+00 : f32
    %35 = vector.broadcast %cst_11 : f32 to vector<8x1xf32>
    %36 = arith.select %30, %31, %35 : vector<8x1xi1>, vector<8x1xf32>
    %37 = tpu.iota {dimensions = array<i32: 2>} : vector<1x1x128xi32>
    %c128_i32 = arith.constant 128 : i32
    %c0_i32_12 = arith.constant 0 : i32
    %38 = arith.cmpi eq, %c128_i32, %c0_i32_12 : i32
    %c1_i32_13 = arith.constant 1 : i32
    %39 = arith.select %38, %c1_i32_13, %c128_i32 : i32
    %40 = arith.remsi %arg1, %39 : i32
    %c0_i32_14 = arith.constant 0 : i32
    %41 = arith.cmpi ne, %40, %c0_i32_14 : i32
    %c0_i32_15 = arith.constant 0 : i32
    %42 = arith.cmpi slt, %40, %c0_i32_15 : i32
    %c0_i32_16 = arith.constant 0 : i32
    %43 = arith.cmpi slt, %39, %c0_i32_16 : i32
    %44 = arith.xori %42, %43 : i1
    %45 = arith.andi %44, %41 : i1
    %46 = arith.addi %40, %39 : i32
    %47 = arith.select %45, %46, %40 : i32
    %48 = vector.broadcast %47 : i32 to vector<1x1x128xi32>
    %49 = arith.cmpi eq, %37, %48 : vector<1x1x128xi32>
    %c0_17 = arith.constant 0 : index
    %c0_18 = arith.constant 0 : index
    %c0_19 = arith.constant 0 : index
    %50 = vector.load %arg5[%c0_17, %c0_18, %c0_19] : memref<1x1x128xf32, #tpu.memory_space<vmem>>, vector<1x1x128xf32>
    %51 = vector.shape_cast %34 : vector<8x1xf32> to vector<1x8x1xf32>
    %cst_20 = arith.constant dense<0.000000e+00> : vector<1xf32>
    %52 = vector.multi_reduction <add>, %51, %cst_20 [1, 2] : vector<1x8x1xf32> to vector<1xf32>
    %53 = vector.shape_cast %52 : vector<1xf32> to vector<1x1x1xf32>
    %54 = vector.extract %53[0, 0, 0] : f32 from vector<1x1x1xf32>
    %cst_21 = arith.constant 0.000000e+00 : f32
    %55 = vector.broadcast %54 : f32 to vector<1x1x128xf32>
    %56 = vector.broadcast %cst_21 : f32 to vector<1x1x128xf32>
    %57 = arith.select %49, %55, %56 : vector<1x1x128xi1>, vector<1x1x128xf32>
    %58 = arith.addf %50, %57 : vector<1x1x128xf32>
    %c0_22 = arith.constant 0 : index
    %c0_23 = arith.constant 0 : index
    %c0_24 = arith.constant 0 : index
    %59 = vector.load %arg5[%c0_22, %c0_23, %c0_24] : memref<1x1x128xf32, #tpu.memory_space<vmem>>, vector<1x1x128xf32>
    tpu.vector_store %arg5[%c0_22, %c0_23, %c0_24], %58 {strides = array<i32>} : memref<1x1x128xf32, #tpu.memory_space<vmem>>, vector<1x1x128xf32>,
    %c0_25 = arith.constant 0 : index
    %c0_26 = arith.constant 0 : index
    %c0_27 = arith.constant 0 : index
    %60 = vector.load %arg6[%c0_25, %c0_26, %c0_27] : memref<1x1x128xf32, #tpu.memory_space<vmem>>, vector<1x1x128xf32>
    %61 = vector.shape_cast %36 : vector<8x1xf32> to vector<1x8x1xf32>
    %cst_28 = arith.constant dense<0.000000e+00> : vector<1xf32>
    %62 = vector.multi_reduction <add>, %61, %cst_28 [1, 2] : vector<1x8x1xf32> to vector<1xf32>
    %63 = vector.shape_cast %62 : vector<1xf32> to vector<1x1x1xf32>
    %64 = vector.extract %63[0, 0, 0] : f32 from vector<1x1x1xf32>
    %cst_29 = arith.constant 0.000000e+00 : f32
    %65 = vector.broadcast %64 : f32 to vector<1x1x128xf32>
    %66 = vector.broadcast %cst_29 : f32 to vector<1x1x128xf32>
    %67 = arith.select %49, %65, %66 : vector<1x1x128xi1>, vector<1x1x128xf32>
    %68 = arith.addf %60, %67 : vector<1x1x128xf32>
    %c0_30 = arith.constant 0 : index
    %c0_31 = arith.constant 0 : index
    %c0_32 = arith.constant 0 : index
    %69 = vector.load %arg6[%c0_30, %c0_31, %c0_32] : memref<1x1x128xf32, #tpu.memory_space<vmem>>, vector<1x1x128xf32>
    tpu.vector_store %arg6[%c0_30, %c0_31, %c0_32], %68 {strides = array<i32>} : memref<1x1x128xf32, #tpu.memory_space<vmem>>, vector<1x1x128xf32>,
    return
  }
  func.func @transform_0(%arg0: i32, %arg1: i32) -> (i32, i32) {
    %c1_i32 = arith.constant 1 : i32
    %0 = arith.muli %arg0, %c1_i32 : i32
    %1 = arith.addi %0, %arg1 : i32
    %c0_i32 = arith.constant 0 : i32
    %2 = arith.minsi %1, %c0_i32 : i32
    %c0_i32_0 = arith.constant 0 : i32
    %c0_i32_1 = arith.constant 0 : i32
    return %2, %c0_i32_0 : i32, i32
  }
  func.func @transform_1(%arg0: i32, %arg1: i32) -> (i32, i32) {
    %c1_i32 = arith.constant 1 : i32
    %0 = arith.muli %arg0, %c1_i32 : i32
    %1 = arith.addi %0, %arg1 : i32
    %c0_i32 = arith.constant 0 : i32
    %2 = arith.minsi %1, %c0_i32 : i32
    %c0_i32_0 = arith.constant 0 : i32
    %c0_i32_1 = arith.constant 0 : i32
    return %2, %c0_i32_0 : i32, i32
  }
  func.func @transform_2(%arg0: i32, %arg1: i32) -> (i32, i32) {
    %c1_i32 = arith.constant 1 : i32
    %0 = arith.muli %arg0, %c1_i32 : i32
    %1 = arith.addi %0, %arg1 : i32
    %c0_i32 = arith.constant 0 : i32
    %2 = arith.minsi %1, %c0_i32 : i32
    %c0_i32_0 = arith.constant 0 : i32
    %c0_i32_1 = arith.constant 0 : i32
    return %2, %c0_i32_0 : i32, i32
  }
  func.func @transform_3(%arg0: i32, %arg1: i32) -> (i32, i32, i32) {
    %c0_i32 = arith.constant 0 : i32
    %c0_i32_0 = arith.constant 0 : i32
    %c0_i32_1 = arith.constant 0 : i32
    return %arg0, %c0_i32, %c0_i32_0 : i32, i32, i32
  }
  func.func @transform_4(%arg0: i32, %arg1: i32) -> (i32, i32, i32) {
    %c0_i32 = arith.constant 0 : i32
    %c0_i32_0 = arith.constant 0 : i32
    %c0_i32_1 = arith.constant 0 : i32
    return %arg0, %c0_i32, %c0_i32_0 : i32, i32, i32
  }
}

</mosaic_0001>

<llo_original>
// kernel: _cross_entropy_pallas.1
$region0: #{_cross_entropy_pallas.1}
  #allocation0 [shape = 'u32[]', space=smem, size = 0x4, offset = 0x4, fixed_abs, tag = 'smem constant byte address 0x4 - core index']
  #allocation1 [shape = 'u32[72,128]{1,0:T(1,128)}', space=vmem, size = 0x9000, scoped, tag = 'internal scratch']
  %s0 = inlined_call_operand.vmem [shape: f32[8,10], index: 0, kind: input, shape index: {}]
  %s1 = inlined_call_operand.vmem [shape: s32[8,1], index: 1, kind: input, shape index: {}]
  %s2 = inlined_call_operand.vmem [shape: f32[8,1], index: 2, kind: input, shape index: {}]
  %s3 = inlined_call_operand.vmem [shape: f32[1,1,128], index: 3, kind: output, shape index: {0}]
  %s4 = inlined_call_operand.vmem [shape: f32[1,1,128], index: 4, kind: output, shape index: {1}]
  %5 = xla_tuple %s3, %s4
  %s6 = sld [smem:[#allocation0]]
  $region34: #{_cross_entropy_pallas.1} parent=0
    _
  %s8 = ssub.s32 1, %s6
  %s9 = scalar_select 0, %s8, %s6
  // Predicated region
  $region2: #{_cross_entropy_pallas.1} parent=0 // pred_check
    _
  $region3: #{_cross_entropy_pallas.1} parent=0 // pred_check_branch
    %11 = sbr.rel (0) target = $region5
  $region4: #{_cross_entropy_pallas.1} parent=0 // pred_region
    %s12 = sadd.s32 0, 0
    %p13 = scmp.lt.s32.totalorder %s12, 0
    %s14 = scalar_select %p13, %s12, 0
    %p15 = scmp.lt.s32.totalorder %s14, 0
    %s16 = scalar_select %p15, %s14, 0
    %s17 = smul.addr %s16, 8
    %s18 = scalar_lea.vmem %s0, %s17
    %s19 = sadd.s32 0, 0
    %p20 = scmp.lt.s32.totalorder %s19, 0
    %s21 = scalar_select %p20, %s19, 0
  $region5: #{_cross_entropy_pallas.1} parent=0 // pred_fallthru
    _
  // Predicated region
  $region6: #{_cross_entropy_pallas.1} parent=0 // pred_check
    _
  $region7: #{_cross_entropy_pallas.1} parent=0 // pred_check_branch
    %23 = sbr.rel (0) target = $region9
  $region8: #{_cross_entropy_pallas.1} parent=0 // pred_region
    %s24 = sadd.s32 0, 0
    %p25 = scmp.lt.s32.totalorder %s24, 0
    %s26 = scalar_select %p25, %s24, 0
    %p27 = scmp.lt.s32.totalorder %s26, 0
    %s28 = scalar_select %p27, %s26, 0
    %s29 = smul.addr %s28, 8
    %s30 = scalar_lea.vmem %s1, %s29
    %s31 = sadd.s32 0, 0
    %p32 = scmp.lt.s32.totalorder %s31, 0
    %s33 = scalar_select %p32, %s31, 0
  $region9: #{_cross_entropy_pallas.1} parent=0 // pred_fallthru
    _
  // Predicated region
  $region10: #{_cross_entropy_pallas.1} parent=0 // pred_check
    _
  $region11: #{_cross_entropy_pallas.1} parent=0 // pred_check_branch
    %35 = sbr.rel (0) target = $region13
  $region12: #{_cross_entropy_pallas.1} parent=0 // pred_region
    %s36 = sadd.s32 0, 0
    %p37 = scmp.lt.s32.totalorder %s36, 0
    %s38 = scalar_select %p37, %s36, 0
    %p39 = scmp.lt.s32.totalorder %s38, 0
    %s40 = scalar_select %p39, %s38, 0
    %s41 = smul.addr %s40, 8
    %s42 = scalar_lea.vmem %s2, %s41
    %s43 = sadd.s32 0, 0
    %p44 = scmp.lt.s32.totalorder %s43, 0
    %s45 = scalar_select %p44, %s43, 0
  $region13: #{_cross_entropy_pallas.1} parent=0 // pred_fallthru
    _
  %s46 = sadd.s32 0, 0
  %p47 = scmp.lt.s32.totalorder %s46, 0
  %s48 = scalar_select %p47, %s46, 0
  %p49 = scmp.lt.s32.totalorder %s48, 0
  %s50 = scalar_select %p49, %s48, 0
  %s51 = smul.addr %s50, 8
  %s52 = scalar_lea.vmem %s0, %s51
  %s53 = sadd.s32 0, 0
  %p54 = scmp.lt.s32.totalorder %s53, 0
  %s55 = scalar_select %p54, %s53, 0
  %p56 = scmp.lt.s32.totalorder %s55, 0
  %s57 = scalar_select %p56, %s55, 0
  %s58 = smul.addr %s57, 8
  %s59 = scalar_lea.vmem %s1, %s58
  %s60 = sadd.s32 0, 0
  %p61 = scmp.lt.s32.totalorder %s60, 0
  %s62 = scalar_select %p61, %s60, 0
  %p63 = scmp.lt.s32.totalorder %s62, 0
  %s64 = scalar_select %p63, %s62, 0
  %s65 = smul.addr %s64, 8
  %s66 = scalar_lea.vmem %s2, %s65
  %s67 = sadd.s32 0, 0
  %p68 = scmp.lt.s32.totalorder %s67, 0
  %s69 = scalar_select %p68, %s67, 0
  %p70 = scmp.lt.s32.totalorder %s69, 0
  %s71 = scalar_select %p70, %s69, 0
  %s72 = smul.addr %s71, 8
  %s73 = scalar_lea.vmem %s0, %s72
  %s74 = sadd.s32 0, 0
  %p75 = scmp.lt.s32.totalorder %s74, 0
  %s76 = scalar_select %p75, %s74, 0
  %s77 = sadd.s32 0, 0
  %p78 = scmp.lt.s32.totalorder %s77, 0
  %s79 = scalar_select %p78, %s77, 0
  %p80 = scmp.lt.s32.totalorder %s79, 0
  %s81 = scalar_select %p80, %s79, 0
  %s82 = smul.addr %s81, 8
  %s83 = scalar_lea.vmem %s1, %s82
  %s84 = sadd.s32 0, 0
  %p85 = scmp.lt.s32.totalorder %s84, 0
  %s86 = scalar_select %p85, %s84, 0
  %s87 = sadd.s32 0, 0
  %p88 = scmp.lt.s32.totalorder %s87, 0
  %s89 = scalar_select %p88, %s87, 0
  %p90 = scmp.lt.s32.totalorder %s89, 0
  %s91 = scalar_select %p90, %s89, 0
  %s92 = smul.addr %s91, 8
  %s93 = scalar_lea.vmem %s2, %s92
  %s94 = sadd.s32 0, 0
  %p95 = scmp.lt.s32.totalorder %s94, 0
  %s96 = scalar_select %p95, %s94, 0
  %p97 = scmp.eq.s32.totalorder 0, 0
  // Predicated region
  $region14: #{_cross_entropy_pallas.1} parent=0 // pred_check
    %p98 = pneg %p97
  $region15: #{_cross_entropy_pallas.1} parent=0 // pred_check_branch
    %100 = sbr.rel (%p98) target = $region17
  $region16: #{_cross_entropy_pallas.1} parent=0 // pred_region
    %101 = vst [vmem:[%s3] sm:$0x1] 0.0
    %102 = vst [vmem:[%s4] sm:$0x1] 0.0
  $region17: #{_cross_entropy_pallas.1} parent=0 // pred_fallthru
    _
  %v103 = vld [vmem:[%s73] sm:$0xff]
  %v104 = vld [vmem:[%s83] sm:$0xff]
  %v105 = vlaneseq
  %v106 = vand.u32 %v105, 127
  %107 = vset.pattern.permute.xlu0 0
  %108 = vperm.xlu0 %107, %v104
  %v109 = vpop.permute.xlu0 %108
  %vm110 = vcmp.eq.s32.totalorder %v106, %v109
  %vm111 = vcmask 80896
  %v112 = vsel %vm111, %v103, -inf
  %113 = vmax.xlane.f32.xlu0 %v112
  %v114 = vpop.xlane.xlu0 %113
  %v115 = vsel %vm110, %v103, 0.0
  %v116 = vsel %vm111, %v115, 0.0
  %117 = vadd.xlane.f32.xlu0 %v116
  %v118 = vpop.xlane.xlu0 %117
  %v119 = vsub.f32 %v103, %v114
  %v120 = vmul.f32 %v119, 1.442695
  %v121 = vpow.pop %v120
  %v122 = vsel %vm111, %v121, 0.0
  %123 = vadd.xlane.f32.xlu0 %v122
  %v124 = vpop.xlane.xlu0 %123
  %v125 = vlog2.pop %v124
  %v126 = vmul.f32 %v125, 0.6931472
  %v127 = vsub.f32 %v118, %v114
  %v128 = vsub.f32 %v126, %v127
  %s129 = sadd.s32 0, 0
  %s130 = smul.u32 %s129, 8
  %v131 = vlaneseq
  %v132 = vshrl.u32 %v131, 7
  %v133 = vstv %s130
  %v134 = vadd.s32 %v133, %v132
  %vm135 = vcmp.lt.s32.totalorder %v134, 8
  %v136 = vld [vmem:[%s93] sm:$0xff]
  %v137 = vmul.f32 %v136, %v128
  %v138 = vsel %vm135, %v137, 0.0
  %v139 = vsel %vm135, %v136, 0.0
  %s140 = ssub.s32 0, 0
  %s141 = ssub.s32 0, 0
  %p142 = scmp.ne.s32.totalorder 0, 0
  %p143 = scmp.lt.s32.totalorder 0, 0
  %p144 = pnand %p143, %p142
  %p145 = pneg %p144
  %s146 = sadd.s32 0, 128
  %s147 = scalar_select %p145, %s146, 0
  %v148 = vstv %s147
  %vm149 = vcmp.eq.s32.totalorder %v106, %v148
  %v150 = vld [vmem:[%s3] sm:$0x1]
  %vm151 = vcmask 7168
  %v152 = vsel %vm151, %v138, 0.0
  %153 = vadd.xlane.f32.xlu0 %v152
  %v154 = vpop.xlane.xlu0 %153
  %v155 = vrot.slane %v154, 4
  %v156 = vadd.f32 %v154, %v155
  %v157 = vrot.slane %v156, 2
  %v158 = vadd.f32 %v156, %v157
  %v159 = vrot.slane %v158, 1
  %v160 = vadd.f32 %v158, %v159
  %s161 = vtos %v160
  %v162 = vstv %s161
  %v163 = vsel %vm149, %v162, 0.0
  %v164 = vadd.f32 %v150, %v163
  %165 = vst [vmem:[%s3] sm:$0x1] %v164
  %v166 = vld [vmem:[%s4] sm:$0x1]
  %v167 = vsel %vm151, %v139, 0.0
  %168 = vadd.xlane.f32.xlu0 %v167
  %v169 = vpop.xlane.xlu0 %168
  %v170 = vrot.slane %v169, 4
  %v171 = vadd.f32 %v169, %v170
  %v172 = vrot.slane %v171, 2
  %v173 = vadd.f32 %v171, %v172
  %v174 = vrot.slane %v173, 1
  %v175 = vadd.f32 %v173, %v174
  %s176 = vtos %v175
  %v177 = vstv %s176
  %v178 = vsel %vm149, %v177, 0.0
  %v179 = vadd.f32 %v166, %v178
  %180 = vst [vmem:[%s4] sm:$0x1] %v179
  // Predicated region
  $region18: #{_cross_entropy_pallas.1} parent=0 // pred_check
    _
  $region19: #{_cross_entropy_pallas.1} parent=0 // pred_check_branch
    %182 = sbr.rel (0) target = $region21
  $region20: #{_cross_entropy_pallas.1} parent=0 // pred_region
    _
  $region21: #{_cross_entropy_pallas.1} parent=0 // pred_fallthru
    _
  // Predicated region
  $region22: #{_cross_entropy_pallas.1} parent=0 // pred_check
    _
  $region23: #{_cross_entropy_pallas.1} parent=0 // pred_check_branch
    %184 = sbr.rel (0) target = $region25
  $region24: #{_cross_entropy_pallas.1} parent=0 // pred_region
    _
  $region25: #{_cross_entropy_pallas.1} parent=0 // pred_fallthru
    _
  // Predicated region
  $region26: #{_cross_entropy_pallas.1} parent=0 // pred_check
    _
  $region27: #{_cross_entropy_pallas.1} parent=0 // pred_check_branch
    %186 = sbr.rel (0) target = $region29
  $region28: #{_cross_entropy_pallas.1} parent=0 // pred_region
    _
  $region29: #{_cross_entropy_pallas.1} parent=0 // pred_fallthru
    _
  // Predicated region
  $region30: #{_cross_entropy_pallas.1} parent=0 // pred_check
    _
  $region31: #{_cross_entropy_pallas.1} parent=0 // pred_check_branch
    %188 = sbr.rel (0) target = $region33
  $region32: #{_cross_entropy_pallas.1} parent=0 // pred_region
    _
  $region33: #{_cross_entropy_pallas.1} parent=0 // pred_fallthru
    _

</llo_original>
